<compile_context>
chip_gen: v7x
topology: tpu7x:2x2x1
jax: 0.10.0
libtpu: 0.0.40
codegen_flags: <defaults>
</compile_context>

<pallas_src>
import math

import jax
import jax.numpy as jnp
from jax.experimental import pallas as pl
from jax.experimental.pallas import tpu as pltpu


# ----------------------------------------------------------------------------
# Generation-aware VMEM budget + tile picker.
# ----------------------------------------------------------------------------
def _vmem_limit_bytes():
    try:
        cap = int(pltpu.get_tpu_info().vmem_capacity_bytes)   # 64MiB v7x, 128MiB v5e/v6e
    except Exception:
        cap = 64 * 1024 * 1024
    return min((cap * 3) // 4, 100 * 1024 * 1024)


_TILE_CANDIDATES = (4096, 2048, 1024, 512, 256, 128)


def _pick_tile(total, row_bytes, budget_bytes):
    """Largest candidate tile dividing `total` whose footprint fits the budget."""
    divs = [c for c in _TILE_CANDIDATES if c <= total and total % c == 0]
    for cand in divs:                       # descending
        if cand * row_bytes <= budget_bytes:
            return cand
    return divs[-1] if divs else total


def _dot(a, b):
    return jnp.dot(a, b, preferred_element_type=jnp.float32)


# ----------------------------------------------------------------------------
# Kernel 1: ScalarEmbeddingSine(normalize=False) fused with edge_embed Linear.
#           Single sin(pos + phase) instead of sin/cos/select (EUP-bound).
# ----------------------------------------------------------------------------
def sine_edge_embed_kernel(attr_ref, invdt_ref, phase_ref, we_ref, be_ref, out_ref):
    pos = attr_ref[...] * invdt_ref[...] + phase_ref[...]       # (Te, D0)
    emb = jnp.sin(pos)                                          # cos(x) = sin(x + pi/2)
    out_ref[...] = (_dot(emb.astype(jnp.bfloat16), we_ref[...])
                    + be_ref[...]).astype(out_ref.dtype)


def sine_edge_embed(attr, inv_dim_t, phase, we_bf, be, *, tile, vmem_limit):
    e2p = attr.shape[0]
    d0 = we_bf.shape[1]
    return pl.pallas_call(
        sine_edge_embed_kernel,
        out_shape=jax.ShapeDtypeStruct((e2p, d0), jnp.bfloat16),
        grid_spec=pltpu.PrefetchScalarGridSpec(
            num_scalar_prefetch=0,
            grid=(e2p // tile,),
            in_specs=[
                pl.BlockSpec((tile, 1), lambda i: (i, 0)),
                pl.BlockSpec((1, d0), lambda i: (0, 0)),
                pl.BlockSpec((1, d0), lambda i: (0, 0)),
                pl.BlockSpec((d0, d0), lambda i: (0, 0)),
                pl.BlockSpec((1, d0), lambda i: (0, 0)),
            ],
            out_specs=pl.BlockSpec((tile, d0), lambda i: (i, 0)),
        ),
        compiler_params=pltpu.CompilerParams(
            dimension_semantics=("parallel",), vmem_limit_bytes=vmem_limit),
    )(attr, inv_dim_t, phase, we_bf, be)


# ----------------------------------------------------------------------------
# Kernel 2 (node phase, once per layer): GINConv(train_eps) + 2-layer nn +
#           GraphNorm + ReLU + AGNN node projections u|v|b|c.
#           adj / gnb consumed here exactly once -> never resident in the
#           edge-tiled kernel.
# ----------------------------------------------------------------------------
def node_phase_kernel(h_ref, adj_ref, gnb_ref, invc_ref, eps_ref, tnode_ref,
                      gw1_ref, gb1_ref, gw2_ref, gb2_ref,
                      gnw_ref, gnbeta_ref, gnms_ref, wnode_ref, bnode_ref,
                      acc0_ref, v_ref, b_ref, c_ref):
    dh = v_ref.shape[1]
    x = h_ref[...]                                              # (N, Din) bf16
    adj = adj_ref[...].astype(jnp.bfloat16)                     # int8 -> bf16 MXU path

    # GINConv: (1+eps)*x_i + sum_{j in N(i)} x_j ; adj[i, j] = #edges j->i.
    agg = (1.0 + eps_ref[...]) * x.astype(jnp.float32) + _dot(adj, x)
    hmid = jnp.maximum(_dot(agg.astype(jnp.bfloat16), gw1_ref[...]) + gb1_ref[...], 0.0)
    h2 = _dot(hmid.astype(jnp.bfloat16), gw2_ref[...]) + gb2_ref[...]   # (N, Dh) f32

    # GraphNorm over bn_batch groups (bf16 operands, f32 accumulation).
    gnb = gnb_ref[...]                                          # (G, N) bf16
    invc = invc_ref[...]                                        # (G, 1) f32
    mean = _dot(gnb, h2.astype(jnp.bfloat16)) * invc            # (G, Dh)
    mean_n = jnp.einsum('gn,gd->nd', gnb, mean.astype(jnp.bfloat16),
                        preferred_element_type=jnp.float32)
    centered = h2 - gnms_ref[...] * mean_n                      # (N, Dh)
    cb = centered.astype(jnp.bfloat16)
    var = _dot(gnb, cb * cb) * invc                             # (G, Dh)
    inv_std_g = jax.lax.rsqrt(var + 1e-5)                       # G*Dh EUP ops only
    inv_std_n = jnp.einsum('gn,gd->nd', gnb, inv_std_g.astype(jnp.bfloat16),
                           preferred_element_type=jnp.float32)
    h_gn = jnp.maximum(gnw_ref[...] * centered * inv_std_n + gnbeta_ref[...], 0.0)

    # AGNN node projections u|v|b|c: one (Dh, 4*Dh) matmul (once per layer).
    proj = _dot(h_gn.astype(jnp.bfloat16), wnode_ref[...]) + bnode_ref[...]
    acc0_ref[...] = proj[:, :dh] + tnode_ref[...]               # u-proj + time term
    v_ref[...] = proj[:, dh:2 * dh].astype(jnp.bfloat16)
    b_ref[...] = proj[:, 2 * dh:3 * dh].astype(jnp.bfloat16)
    c_ref[...] = proj[:, 3 * dh:].astype(jnp.bfloat16)


def node_phase(h, adj_i8, gnb, invc, eps, t_node, lw, *, vmem_limit):
    n = h.shape[0]
    dh = lw['gin_w2_bf'].shape[1]

    def full2(a):
        return pl.BlockSpec(a.shape, lambda i: (0, 0))

    out_shape = (jax.ShapeDtypeStruct((n, dh), jnp.float32),    # acc0 = u + time
                 jax.ShapeDtypeStruct((n, dh), jnp.bfloat16),   # v
                 jax.ShapeDtypeStruct((n, dh), jnp.bfloat16),   # b
                 jax.ShapeDtypeStruct((n, dh), jnp.bfloat16))   # c
    out_specs = tuple(pl.BlockSpec((n, dh), lambda i: (0, 0)) for _ in range(4))
    return pl.pallas_call(
        node_phase_kernel,
        out_shape=out_shape,
        grid_spec=pltpu.PrefetchScalarGridSpec(
            num_scalar_prefetch=0,
            grid=(1,),
            in_specs=[full2(h), full2(adj_i8), full2(gnb), full2(invc), full2(eps),
                      full2(t_node),
                      full2(lw['gin_w1_bf']), full2(lw['gin_b1']),
                      full2(lw['gin_w2_bf']), full2(lw['gin_b2']),
                      full2(lw['gn_w']), full2(lw['gn_b']), full2(lw['gn_ms']),
                      full2(lw['wnode_bf']), full2(lw['bnode'])],
            out_specs=out_specs,
        ),
        compiler_params=pltpu.CompilerParams(
            dimension_semantics=("arbitrary",), vmem_limit_bytes=vmem_limit),
    )(h, adj_i8, gnb, invc, eps, t_node,
      lw['gin_w1_bf'], lw['gin_b1'], lw['gin_w2_bf'], lw['gin_b2'],
      lw['gn_w'], lw['gn_b'], lw['gn_ms'], lw['wnode_bf'], lw['bnode'])


# ----------------------------------------------------------------------------
# Kernel 3 (edge phase): AGNN anisotropic message passing over mapping edges.
#           Grid (2, T): leading "parallel" axis splits the 2E edge range
#           across TensorCores (per-core partial accumulator), inner
#           "arbitrary" axis streams int8 one-hot operator tiles.
# ----------------------------------------------------------------------------
def edge_phase_kernel(e_ref, ssrc_ref, sdst_ref,
                      v_ref, b_ref, c_ref, wa_ref, ba_ref,
                      hpart_ref, eout_ref, acc_ref):
    step = pl.program_id(1)

    @pl.when(step == 0)
    def _init():
        acc_ref[...] = jnp.zeros_like(acc_ref)

    ssrc = ssrc_ref[...].astype(jnp.bfloat16)                   # int8 -> bf16
    sdst = sdst_ref[...].astype(jnp.bfloat16)
    v_src = _dot(ssrc, v_ref[...])                              # (Te, Dh) f32
    b_src = _dot(ssrc, b_ref[...])
    c_dst = _dot(sdst, c_ref[...])
    e_new = _dot(e_ref[...], wa_ref[...]) + ba_ref[...] + b_src + c_dst
    gates = jax.nn.sigmoid(e_new)                               # f32 VPU math
    msg = (gates * v_src).astype(jnp.bfloat16)
    # scatter-add to destination nodes: contract edge axis (axis 0) of s_dst.
    acc_ref[...] += jnp.einsum('en,ed->nd', sdst, msg,
                               preferred_element_type=jnp.float32)
    eout_ref[...] = jnp.maximum(e_new, 0.0).astype(eout_ref.dtype)

    @pl.when(step == pl.num_programs(1) - 1)
    def _finalize():
        hpart_ref[...] = acc_ref[...]


def edge_phase(e, ssrc, sdst, v, b, c, wa_bf, ba, *, edge_tile, vmem_limit):
    e2p, de = e.shape
    n = ssrc.shape[1]
    dh = v.shape[1]
    tiles_total = e2p // edge_tile
    assert tiles_total % 2 == 0
    t_half = tiles_total // 2

    def full2(a):
        return pl.BlockSpec(a.shape, lambda ci, i: (0, 0))

    in_specs = [
        pl.BlockSpec((edge_tile, de), lambda ci, i: (ci * t_half + i, 0)),   # e
        pl.BlockSpec((edge_tile, n), lambda ci, i: (ci * t_half + i, 0)),    # s_src int8
        pl.BlockSpec((edge_tile, n), lambda ci, i: (ci * t_half + i, 0)),    # s_dst int8
        full2(v), full2(b), full2(c), full2(wa_bf), full2(ba),
    ]
    out_specs = (
        pl.BlockSpec((n, dh), lambda ci, i: (ci, 0)),                        # h_part
        pl.BlockSpec((edge_tile, dh), lambda ci, i: (ci * t_half + i, 0)),   # e_out
    )
    return pl.pallas_call(
        edge_phase_kernel,
        out_shape=(jax.ShapeDtypeStruct((2 * n, dh), jnp.float32),
                   jax.ShapeDtypeStruct((e2p, dh), jnp.bfloat16)),
        grid_spec=pltpu.PrefetchScalarGridSpec(
            num_scalar_prefetch=0,
            grid=(2, t_half),
            in_specs=in_specs,
            out_specs=out_specs,
            scratch_shapes=[pltpu.VMEM((n, dh), jnp.float32)],               # accumulator
        ),
        compiler_params=pltpu.CompilerParams(
            dimension_semantics=("parallel", "arbitrary"),
            vmem_limit_bytes=vmem_limit),
    )(e, ssrc, sdst, v, b, c, wa_bf, ba)


# ----------------------------------------------------------------------------
# Kernel 4: mapMatrix MLP head + to_undirected(add) symmetrization.
#           Reads forward / reverse halves of e_emb via offset index_maps
#           (no wrapper slices); lane-dense (1, Em_p) output.
# ----------------------------------------------------------------------------
def map_mlp_kernel(ef_ref, er_ref, w1_ref, b1_ref, w2_ref, b2_ref,
                   w3r_ref, b3_ref, out_ref):
    def head(x):                                                # (Tm, Dh) bf16
        h1 = jnp.maximum(_dot(x, w1_ref[...]) + b1_ref[...], 0.0)
        return jnp.maximum(_dot(h1.astype(jnp.bfloat16), w2_ref[...])
                           + b2_ref[...], 0.0)                  # (Tm, Dh) f32

    # score(i->j) + score(j->i); the last Linear is affine, so sum features
    # first and do ONE lane-dense (1, Tm) projection (trans_b contraction).
    hs = head(ef_ref[...]) + head(er_ref[...])
    s = jnp.einsum('kd,td->kt', w3r_ref[...], hs,
                   preferred_element_type=jnp.float32)          # (1, Tm)
    out_ref[...] = s + 2.0 * b3_ref[...]


def map_mlp(e_emb, em_p, w1_bf, b1, w2_bf, b2, w3r, b3, *, tile, vmem_limit):
    dh = e_emb.shape[1]
    t_half = em_p // tile

    def full2(a):
        return pl.BlockSpec(a.shape, lambda i: (0, 0))

    return pl.pallas_call(
        map_mlp_kernel,
        out_shape=jax.ShapeDtypeStruct((1, em_p), jnp.float32),
        grid_spec=pltpu.PrefetchScalarGridSpec(
            num_scalar_prefetch=0,
            grid=(em_p // tile,),
            in_specs=[
                pl.BlockSpec((tile, dh), lambda i: (i, 0)),              # forward half
                pl.BlockSpec((tile, dh), lambda i: (i + t_half, 0)),     # reverse half
                full2(w1_bf), full2(b1), full2(w2_bf), full2(b2),
                full2(w3r), full2(b3),
            ],
            out_specs=pl.BlockSpec((1, tile), lambda i: (0, i)),
        ),
        compiler_params=pltpu.CompilerParams(
            dimension_semantics=("parallel",), vmem_limit_bytes=vmem_limit),
    )(e_emb, e_emb, w1_bf, b1, w2_bf, b2, w3r, b3)


# ----------------------------------------------------------------------------
# Parameter init (deterministic, synthetic).
# ----------------------------------------------------------------------------
def init_params(key, num_labels, hidden_dims):
    d0 = hidden_dims[0]
    td = d0 // 2
    keys = iter(jax.random.split(key, 64))

    def lin(din, dout):
        w = 0.1 * jax.random.normal(next(keys), (din, dout), jnp.float32)
        b = jnp.zeros((1, dout), jnp.float32)
        return w, b

    params = {}
    params['time_w1'], params['time_b1'] = lin(d0, td)
    params['time_w2'], params['time_b2'] = lin(td, td)
    params['edge_w'], params['edge_b'] = lin(d0, d0)

    layers = []
    for l, dh in enumerate(hidden_dims):
        din = num_labels if l == 0 else hidden_dims[l - 1]
        de_in = hidden_dims[0] if l == 0 else hidden_dims[l - 1]
        lp = {'gin_eps': jnp.zeros((1,), jnp.float32)}           # train_eps init 0
        lp['gin_w1'], lp['gin_b1'] = lin(din, dh)
        lp['gin_w2'], lp['gin_b2'] = lin(dh, dh)
        lp['gn_w'] = jnp.ones((1, dh), jnp.float32)
        lp['gn_b'] = jnp.zeros((1, dh), jnp.float32)
        lp['gn_ms'] = jnp.ones((1, dh), jnp.float32)             # mean_scale
        lp['agnn_wu'], lp['agnn_bu'] = lin(dh, dh)
        lp['agnn_wv'], lp['agnn_bv'] = lin(dh, dh)
        lp['agnn_wa'], lp['agnn_ba'] = lin(de_in, dh)
        lp['agnn_wb'], lp['agnn_bb'] = lin(dh, dh)
        lp['agnn_wc'], lp['agnn_bc'] = lin(dh, dh)
        lp['agnn_wt'], lp['agnn_bt'] = lin(td, dh)
        layers.append(lp)
    params['layers'] = layers

    dl = hidden_dims[-1]
    params['map_w1'], params['map_b1'] = lin(dl, dl * 2)
    params['map_w2'], params['map_b2'] = lin(dl * 2, dl)
    params['map_w3'], params['map_b3'] = lin(dl, 1)
    return params


# ----------------------------------------------------------------------------
# DiffMatch.forward
# ----------------------------------------------------------------------------
def diffmatch_forward(params, data, noise_mapping_attr, t, hidden_dims,
                      num_graph_pairs, *, edge_tile=None):
    d0 = hidden_dims[0]
    x = data['x'].astype(jnp.float32)                  # (N, L)
    edge_index = data['edge_index']                    # (2, Eg)
    batch = data['batch']                              # (N,)
    map_idx = data['edge_index_mapping']               # (2, Em)
    indicator = data['x_indicator']                    # (N, 1)
    n = x.shape[0]
    em = map_idx.shape[1]
    bp = num_graph_pairs
    dh_max = max(hidden_dims)

    # Pad Em to a multiple of 128 so a well-formed edge tile always exists.
    em_p = ((em + 127) // 128) * 128
    pad = em_p - em
    e2p = 2 * em_p

    vmem_limit = _vmem_limit_bytes()
    if edge_tile is None:
        # residents (double-buffered) + f32 accumulator scratch of the edge kernel
        resident = 2 * (3 * n * dh_max * 2 + max(d0, dh_max) * dh_max * 2
                        + dh_max * 4) + n * dh_max * 4
        budget = max(vmem_limit - resident - (4 << 20), 2 << 20)
        # per-edge-row bytes: double-buffered streams (e, s_src, s_dst, e_out)
        # + ~5 f32 temporaries of width Dh.
        row_bytes = 2 * (max(d0, dh_max) * 2 + 2 * n + dh_max * 2) + 20 * dh_max
        edge_tile = _pick_tile(em_p, row_bytes, budget)
    assert em_p % edge_tile == 0 and edge_tile % 32 == 0

    # to_undirected on mapping edges: [fwd ; pad ; rev ; pad] blocks of Em_p rows;
    # pad rows use an out-of-range node index -> all-zero one-hot rows.
    src_f, dst_f = map_idx[0], map_idx[1]
    pad_idx = jnp.full((pad,), n, dtype=map_idx.dtype)
    pad_attr = jnp.zeros((pad,), noise_mapping_attr.dtype)
    und_src = jnp.concatenate([src_f, pad_idx, dst_f, pad_idx])            # (2Em_p,)
    und_dst = jnp.concatenate([dst_f, pad_idx, src_f, pad_idx])
    und_attr = jnp.concatenate([noise_mapping_attr, pad_attr,
                                noise_mapping_attr, pad_attr])

    graph_2 = (indicator[:, 0] == 1)
    bn_batch = batch * 2 + graph_2.astype(batch.dtype)
    g = 2 * bp

    # --- glue: dense operators from indices (int8 in HBM, widened in-kernel) ---
    adj = (jnp.zeros((n, n), jnp.int32)
           .at[edge_index[1], edge_index[0]].add(1)).astype(jnp.int8)      # (N, N)
    gnb_f = jax.nn.one_hot(bn_batch, g, dtype=jnp.float32).T               # (G, N)
    invc = 1.0 / jnp.maximum(jnp.sum(gnb_f, axis=1, keepdims=True), 1.0)   # (G, 1)
    gnb = gnb_f.astype(jnp.bfloat16)
    s_src = jax.nn.one_hot(und_src, n, dtype=jnp.int8)                     # (2Em_p, N)
    s_dst = jax.nn.one_hot(und_dst, n, dtype=jnp.int8)
    p_node = jax.nn.one_hot(batch, bp, dtype=jnp.float32)                  # (N, Bp)

    # --- timestep_embedding(t, D0) + time_embed MLP (tiny -> plain JAX) ---
    # TODO(synk): exact timestep_embedding source not provided; standard
    #             diffusion [cos | sin] sinusoid is used.
    half = d0 // 2
    freqs = jnp.exp(-math.log(10000.0) *
                    jnp.arange(half, dtype=jnp.float32) / half)
    targs = t.astype(jnp.float32)[:, None] * freqs[None, :]
    t_sin = jnp.concatenate([jnp.cos(targs), jnp.sin(targs)], axis=-1)     # (Bp, D0)
    h_t = jnp.maximum(t_sin @ params['time_w1'] + params['time_b1'], 0.0)
    time_emb = h_t @ params['time_w2'] + params['time_b2']                 # (Bp, D0//2)

    # --- edge_pos_embed (one sin + phase) + edge_embed (Pallas, tiled) ---
    j = jnp.arange(d0, dtype=jnp.float32)
    dim_t = 10000.0 ** (2.0 * jnp.floor(j / 2.0) / d0)
    inv_dim_t = (1.0 / dim_t)[None, :]                                     # (1, D0)
    phase = ((jnp.arange(d0) % 2).astype(jnp.float32) * (math.pi / 2.0))[None, :]
    e_emb = sine_edge_embed(und_attr[:, None], inv_dim_t, phase,
                            params['edge_w'].astype(jnp.bfloat16),
                            params['edge_b'],
                            tile=edge_tile, vmem_limit=vmem_limit)         # (2Em_p, D0)

    # --- convolutional_pass: node kernel + 2-core edge kernel per layer ---
    h = x.astype(jnp.bfloat16)
    for lp in params['layers']:
        t_node = p_node @ (time_emb @ lp['agnn_wt'] + lp['agnn_bt'])       # (N, Dh) f32
        lw = dict(
            gin_w1_bf=lp['gin_w1'].astype(jnp.bfloat16), gin_b1=lp['gin_b1'],
            gin_w2_bf=lp['gin_w2'].astype(jnp.bfloat16), gin_b2=lp['gin_b2'],
            gn_w=lp['gn_w'], gn_b=lp['gn_b'], gn_ms=lp['gn_ms'],
            wnode_bf=jnp.concatenate([lp['agnn_wu'], lp['agnn_wv'],
                                      lp['agnn_wb'], lp['agnn_wc']],
                                     axis=1).astype(jnp.bfloat16),
            bnode=jnp.concatenate([lp['agnn_bu'], lp['agnn_bv'],
                                   lp['agnn_bb'], lp['agnn_bc']], axis=1),
        )
        acc0, v_p, b_p, c_p = node_phase(
            h, adj, gnb, invc, lp['gin_eps'].reshape(1, 1), t_node, lw,
            vmem_limit=vmem_limit)
        h_part, e_emb = edge_phase(
            e_emb, s_src, s_dst, v_p, b_p, c_p,
            lp['agnn_wa'].astype(jnp.bfloat16), lp['agnn_ba'],
            edge_tile=edge_tile, vmem_limit=vmem_limit)
        # tiny follow-up op: reduce the two per-core partials, add u+time, ReLU
        h = jnp.maximum(acc0 + h_part[:n] + h_part[n:], 0.0).astype(jnp.bfloat16)

    # --- mapMatrix + to_undirected(add) symmetrization + graph_1-source mask ---
    # NOTE: assumes all mapping edges are oriented graph_1 -> graph_2, so the
    # kept rows are exactly the first Em (forward) copies, matching the
    # original pair_indicator==0 source mask.
    dl = hidden_dims[-1]
    map_budget = max(vmem_limit // 2, 2 << 20)
    map_row_bytes = 2 * (2 * dl * 2) + 24 * dl + 8
    map_tile = _pick_tile(em_p, map_row_bytes, map_budget)
    scores = map_mlp(e_emb, em_p,
                     params['map_w1'].astype(jnp.bfloat16), params['map_b1'],
                     params['map_w2'].astype(jnp.bfloat16), params['map_b2'],
                     params['map_w3'].T, params['map_b3'],
                     tile=map_tile, vmem_limit=vmem_limit)                 # (1, Em_p)
    return scores[0, :em].reshape(em, 1)


# ----------------------------------------------------------------------------
if __name__ == "__main__":
    hidden_dims = [32, 32]
    num_labels = 4
    bp = 2                      # graph pairs (batch)
    n_per_graph = 4
    n_nodes = bp * 2 * n_per_graph   # 16

    key = jax.random.PRNGKey(0)
    k_param, k_label, k_attr = jax.random.split(key, 3)
    params = init_params(k_param, num_labels, hidden_dims)

    # Node features: one-hot labels.
    labels = jax.random.randint(k_label, (n_nodes,), 0, num_labels)
    x = jax.nn.one_hot(labels, num_labels, dtype=jnp.float32)

    # Node ordering: [pair0-g1(4), pair0-g2(4), pair1-g1(4), pair1-g2(4)].
    batch = jnp.repeat(jnp.arange(bp, dtype=jnp.int32), 2 * n_per_graph)
    x_indicator = jnp.tile(
        jnp.concatenate([jnp.zeros((n_per_graph,), jnp.int32),
                         jnp.ones((n_per_graph,), jnp.int32)]), bp)[:, None]

    # Each individual graph is a directed 4-cycle in both directions.
    edges = []
    for gidx in range(bp * 2):
        off = gidx * n_per_graph
        for i in range(n_per_graph):
            jn = (i + 1) % n_per_graph
            edges.append((off + i, off + jn))
            edges.append((off + jn, off + i))
    edge_index = jnp.array(edges, dtype=jnp.int32).T                      # (2, 32)

    # Mapping edges: complete bipartite graph1 -> graph2 within each pair.
    medges = []
    for p in range(bp):
        g1_off = p * 2 * n_per_graph
        g2_off = g1_off + n_per_graph
        for i in range(n_per_graph):
            for jj in range(n_per_graph):
                medges.append((g1_off + i, g2_off + jj))
    edge_index_mapping = jnp.array(medges, dtype=jnp.int32).T             # (2, 32)
    em = edge_index_mapping.shape[1]

    noise_mapping_attr = jax.random.uniform(k_attr, (em,), dtype=jnp.float32)
    t = jnp.array([10.0, 500.0], dtype=jnp.float32)

    data = dict(x=x, edge_index=edge_index, batch=batch,
                edge_index_mapping=edge_index_mapping, x_indicator=x_indicator)

    # edge_tile=32 -> 4 steps per core on the (2, T) edge grid: exercises the
    # per-core accumulator init / finalize path.
    out = diffmatch_forward(params, data, noise_mapping_attr, t,
                            hidden_dims, bp, edge_tile=32)
    out = jax.block_until_ready(out)
    assert out.shape == (em, 1) and out.dtype == jnp.float32
    assert bool(jnp.all(jnp.isfinite(out)))
    print("KERNEL_OK")
</pallas_src>

<mosaic_0001>
module attributes {stable_mosaic.version = 11 : i64} {
  func.func @sine_edge_embed_kernel(%arg0: i32, %arg1: memref<32x1xf32, #tpu.memory_space<vmem>>, %arg2: memref<1x32xf32, #tpu.memory_space<vmem>>, %arg3: memref<1x32xf32, #tpu.memory_space<vmem>>, %arg4: memref<32x32xbf16, #tpu.memory_space<vmem>>, %arg5: memref<1x32xf32, #tpu.memory_space<vmem>>, %arg6: memref<32x32xbf16, #tpu.memory_space<vmem>>) attributes {dimension_semantics = [#tpu.dimension_semantics<parallel>], iteration_bounds = array<i64: 8>, scalar_prefetch = 0 : i64, scratch_operands = 0 : i64, tpu.core_type = #tpu.core_type<tc>, window_params = [{transform_indices = @transform_0, window_bounds = array<i64: 32, 1>}, {pipeline_mode = #tpu.pipeline_mode<synchronous>, transform_indices = @transform_1, window_bounds = array<i64: 1, 32>}, {pipeline_mode = #tpu.pipeline_mode<synchronous>, transform_indices = @transform_2, window_bounds = array<i64: 1, 32>}, {pipeline_mode = #tpu.pipeline_mode<synchronous>, transform_indices = @transform_3, window_bounds = array<i64: 32, 32>}, {pipeline_mode = #tpu.pipeline_mode<synchronous>, transform_indices = @transform_4, window_bounds = array<i64: 1, 32>}, {transform_indices = @transform_5, window_bounds = array<i64: 32, 32>}]} {
    %c0 = arith.constant 0 : index
    %c0_0 = arith.constant 0 : index
    %0 = vector.load %arg1[%c0, %c0_0] : memref<32x1xf32, #tpu.memory_space<vmem>>, vector<32x1xf32>
    %c0_1 = arith.constant 0 : index
    %c0_2 = arith.constant 0 : index
    %1 = vector.load %arg2[%c0_1, %c0_2] : memref<1x32xf32, #tpu.memory_space<vmem>>, vector<1x32xf32>
    %2 = vector.broadcast %0 : vector<32x1xf32> to vector<32x32xf32>
    %3 = vector.broadcast %1 : vector<1x32xf32> to vector<32x32xf32>
    %4 = arith.mulf %2, %3 : vector<32x32xf32>
    %c0_3 = arith.constant 0 : index
    %c0_4 = arith.constant 0 : index
    %5 = vector.load %arg3[%c0_3, %c0_4] : memref<1x32xf32, #tpu.memory_space<vmem>>, vector<1x32xf32>
    %6 = vector.broadcast %5 : vector<1x32xf32> to vector<32x32xf32>
    %7 = arith.addf %4, %6 : vector<32x32xf32>
    %8 = math.sin %7 : vector<32x32xf32>
    %9 = arith.truncf %8 : vector<32x32xf32> to vector<32x32xbf16>
    %c0_5 = arith.constant 0 : index
    %c0_6 = arith.constant 0 : index
    %10 = vector.load %arg4[%c0_5, %c0_6] : memref<32x32xbf16, #tpu.memory_space<vmem>>, vector<32x32xbf16>
    %cst = arith.constant dense<0.000000e+00> : vector<32x32xf32>
    %11 = tpu.matmul %9, %10, %cst {dimension_numbers = #tpu.dot_dimension_numbers<[1], [0], [0], [1], [0, 0, 1, 1], [], []>} : vector<32x32xbf16>, vector<32x32xbf16>, vector<32x32xf32> -> vector<32x32xf32>
    %c0_7 = arith.constant 0 : index
    %c0_8 = arith.constant 0 : index
    %12 = vector.load %arg5[%c0_7, %c0_8] : memref<1x32xf32, #tpu.memory_space<vmem>>, vector<1x32xf32>
    %13 = vector.broadcast %12 : vector<1x32xf32> to vector<32x32xf32>
    %14 = arith.addf %11, %13 : vector<32x32xf32>
    %15 = arith.truncf %14 : vector<32x32xf32> to vector<32x32xbf16>
    %c0_9 = arith.constant 0 : index
    %c0_10 = arith.constant 0 : index
    %16 = vector.load %arg6[%c0_9, %c0_10] : memref<32x32xbf16, #tpu.memory_space<vmem>>, vector<32x32xbf16>
    tpu.vector_store %arg6[%c0_9, %c0_10], %15 {strides = array<i32>} : memref<32x32xbf16, #tpu.memory_space<vmem>>, vector<32x32xbf16>,
    return
  }
  func.func @transform_0(%arg0: i32) -> (i32, i32) {
    %c0_i32 = arith.constant 0 : i32
    %c0_i32_0 = arith.constant 0 : i32
    return %arg0, %c0_i32 : i32, i32
  }
  func.func @transform_1(%arg0: i32) -> (i32, i32) {
    %c0_i32 = arith.constant 0 : i32
    %c0_i32_0 = arith.constant 0 : i32
    %c0_i32_1 = arith.constant 0 : i32
    return %c0_i32, %c0_i32_0 : i32, i32
  }
  func.func @transform_2(%arg0: i32) -> (i32, i32) {
    %c0_i32 = arith.constant 0 : i32
    %c0_i32_0 = arith.constant 0 : i32
    %c0_i32_1 = arith.constant 0 : i32
    return %c0_i32, %c0_i32_0 : i32, i32
  }
  func.func @transform_3(%arg0: i32) -> (i32, i32) {
    %c0_i32 = arith.constant 0 : i32
    %c0_i32_0 = arith.constant 0 : i32
    %c0_i32_1 = arith.constant 0 : i32
    return %c0_i32, %c0_i32_0 : i32, i32
  }
  func.func @transform_4(%arg0: i32) -> (i32, i32) {
    %c0_i32 = arith.constant 0 : i32
    %c0_i32_0 = arith.constant 0 : i32
    %c0_i32_1 = arith.constant 0 : i32
    return %c0_i32, %c0_i32_0 : i32, i32
  }
  func.func @transform_5(%arg0: i32) -> (i32, i32) {
    %c0_i32 = arith.constant 0 : i32
    %c0_i32_0 = arith.constant 0 : i32
    return %arg0, %c0_i32 : i32, i32
  }
}

</mosaic_0001>

<llo_original>
// kernel: tpu_custom_call.1
$region0: #{tpu_custom_call.1}
  #allocation0 [shape = 'u32[]', space=smem, size = 0x4, offset = 0x4, fixed_abs, tag = 'smem constant byte address 0x4 - core index']
  #allocation1 [shape = 'u32[144,128]{1,0:T(1,128)}', space=vmem, size = 0x12000, scoped, tag = 'internal scratch']
  %s0 = inlined_call_operand.vmem [shape: f32[256,1], index: 0, kind: input, shape index: {}]
  %s1 = inlined_call_operand.vmem [shape: f32[1,32], index: 1, kind: input, shape index: {}]
  %s2 = inlined_call_operand.vmem [shape: f32[1,32], index: 2, kind: input, shape index: {}]
  %s3 = inlined_call_operand.vmem [shape: bf16[32,32], index: 3, kind: input, shape index: {}]
  %s4 = inlined_call_operand.vmem [shape: f32[1,32], index: 4, kind: input, shape index: {}]
  %s5 = inlined_call_operand.vmem [shape: bf16[256,32], index: 5, kind: output, shape index: {}]
  %s6 = sld [smem:[#allocation0]]
  $region53: #{tpu_custom_call.1} parent=0
    _
  %s8 = ssub.s32 1, %s6
  %s9 = scalar_select 0, %s8, %s6
  loop: start=0, step=1, limit=10
  $region2: #{tpu_custom_call.1} parent=0 // loop_pre_header
    _
  $region3: #{tpu_custom_call.1} parent=0 // loop_header
    %s11 = sphi 0, %s15
    %p12 = scmp.ge.s32.totalorder %s11, 10
    %s21 = sphi 0, %s23
    %s24 = sphi 0, %s21
    %s25 = sphi 0, %s24
    %s41 = sphi 0, %s25
    %s45 = sphi 0, %s45
    %s47 = sphi 0, %s45
    %s48 = sphi 0, %s47
    %s62 = sphi 0, %s48
    %s66 = sphi 0, %s66
    %s68 = sphi 0, %s66
    %s69 = sphi 0, %s68
    %s83 = sphi 0, %s69
    %s87 = sphi 0, %s87
    %s89 = sphi 0, %s87
    %s90 = sphi 0, %s89
    %s104 = sphi 0, %s90
    %s108 = sphi 0, %s108
    %s110 = sphi 0, %s108
    %s111 = sphi 0, %s110
    %s125 = sphi 0, %s111
    %s131 = sphi 0, %s133
    %s134 = sphi 0, %s131
    %s135 = sphi 0, %s134
    %s151 = sphi 0, %s135
  $region4: #{tpu_custom_call.1} parent=0 // loop_header_branch
    %14 = sbr.rel (%p12) target = $region8
  $region5: #{tpu_custom_call.1} parent=0 // loop_body
    %s16 = ssub.s32 %s11, 1
    %s17 = ssub.s32 %s11, 2
    %s18 = sadd.s32 %s11, 1
    %s19 = ssub.s32 %s11, %s18
    %p20 = scmp.eq.s32.totalorder %s19, 0
    %s22 = sadd.s32 %s21, 1
    %s23 = scalar_select %p20, %s21, %s22
    %p26 = pneg %p20
    %p27 = scmp.eq.s32.totalorder %s11, 7
    %p28 = por %p26, %p27
    %p29 = scmp.ne.s32.totalorder %s21, %s24
    %p30 = scmp.eq.s32.totalorder %s11, 0
    %p31 = por %p29, %p30
    %p32 = scmp.ne.s32.totalorder %s21, %s24
    %p33 = scmp.eq.s32.totalorder %s16, 7
    %p34 = por %p32, %p33
    %p35 = scmp.ne.s32.totalorder %s24, %s25
    %p36 = scmp.eq.s32.totalorder %s16, 0
    %p37 = por %p35, %p36
    %p38 = scmp.ne.s32.totalorder %s24, %s25
    %p39 = scmp.eq.s32.totalorder %s17, 7
    %p40 = por %p38, %p39
    %p42 = scmp.ne.s32.totalorder %s25, %s41
    %p43 = scmp.eq.s32.totalorder %s17, 0
    %p44 = por %p42, %p43
    %s46 = sadd.s32 %s45, 1
    %p49 = scmp.eq.s32.totalorder %s11, 7
    %p50 = scmp.ne.s32.totalorder %s45, %s47
    %p51 = scmp.eq.s32.totalorder %s11, 0
    %p52 = por %p50, %p51
    %p53 = scmp.ne.s32.totalorder %s45, %s47
    %p54 = scmp.eq.s32.totalorder %s16, 7
    %p55 = por %p53, %p54
    %p56 = scmp.ne.s32.totalorder %s47, %s48
    %p57 = scmp.eq.s32.totalorder %s16, 0
    %p58 = por %p56, %p57
    %p59 = scmp.ne.s32.totalorder %s47, %s48
    %p60 = scmp.eq.s32.totalorder %s17, 7
    %p61 = por %p59, %p60
    %p63 = scmp.ne.s32.totalorder %s48, %s62
    %p64 = scmp.eq.s32.totalorder %s17, 0
    %p65 = por %p63, %p64
    %s67 = sadd.s32 %s66, 1
    %p70 = scmp.eq.s32.totalorder %s11, 7
    %p71 = scmp.ne.s32.totalorder %s66, %s68
    %p72 = scmp.eq.s32.totalorder %s11, 0
    %p73 = por %p71, %p72
    %p74 = scmp.ne.s32.totalorder %s66, %s68
    %p75 = scmp.eq.s32.totalorder %s16, 7
    %p76 = por %p74, %p75
    %p77 = scmp.ne.s32.totalorder %s68, %s69
    %p78 = scmp.eq.s32.totalorder %s16, 0
    %p79 = por %p77, %p78
    %p80 = scmp.ne.s32.totalorder %s68, %s69
    %p81 = scmp.eq.s32.totalorder %s17, 7
    %p82 = por %p80, %p81
    %p84 = scmp.ne.s32.totalorder %s69, %s83
    %p85 = scmp.eq.s32.totalorder %s17, 0
    %p86 = por %p84, %p85
    %s88 = sadd.s32 %s87, 1
    %p91 = scmp.eq.s32.totalorder %s11, 7
    %p92 = scmp.ne.s32.totalorder %s87, %s89
    %p93 = scmp.eq.s32.totalorder %s11, 0
    %p94 = por %p92, %p93
    %p95 = scmp.ne.s32.totalorder %s87, %s89
    %p96 = scmp.eq.s32.totalorder %s16, 7
    %p97 = por %p95, %p96
    %p98 = scmp.ne.s32.totalorder %s89, %s90
    %p99 = scmp.eq.s32.totalorder %s16, 0
    %p100 = por %p98, %p99
    %p101 = scmp.ne.s32.totalorder %s89, %s90
    %p102 = scmp.eq.s32.totalorder %s17, 7
    %p103 = por %p101, %p102
    %p105 = scmp.ne.s32.totalorder %s90, %s104
    %p106 = scmp.eq.s32.totalorder %s17, 0
    %p107 = por %p105, %p106
    %s109 = sadd.s32 %s108, 1
    %p112 = scmp.eq.s32.totalorder %s11, 7
    %p113 = scmp.ne.s32.totalorder %s108, %s110
    %p114 = scmp.eq.s32.totalorder %s11, 0
    %p115 = por %p113, %p114
    %p116 = scmp.ne.s32.totalorder %s108, %s110
    %p117 = scmp.eq.s32.totalorder %s16, 7
    %p118 = por %p116, %p117
    %p119 = scmp.ne.s32.totalorder %s110, %s111
    %p120 = scmp.eq.s32.totalorder %s16, 0
    %p121 = por %p119, %p120
    %p122 = scmp.ne.s32.totalorder %s110, %s111
    %p123 = scmp.eq.s32.totalorder %s17, 7
    %p124 = por %p122, %p123
    %p126 = scmp.ne.s32.totalorder %s111, %s125
    %p127 = scmp.eq.s32.totalorder %s17, 0
    %p128 = por %p126, %p127
    %s129 = ssub.s32 %s11, %s18
    %p130 = scmp.eq.s32.totalorder %s129, 0
    %s132 = sadd.s32 %s131, 1
    %s133 = scalar_select %p130, %s131, %s132
    %p136 = pneg %p130
    %p137 = scmp.eq.s32.totalorder %s11, 7
    %p138 = por %p136, %p137
    %p139 = scmp.ne.s32.totalorder %s131, %s134
    %p140 = scmp.eq.s32.totalorder %s11, 0
    %p141 = por %p139, %p140
    %p142 = scmp.ne.s32.totalorder %s131, %s134
    %p143 = scmp.eq.s32.totalorder %s16, 7
    %p144 = por %p142, %p143
    %p145 = scmp.ne.s32.totalorder %s134, %s135
    %p146 = scmp.eq.s32.totalorder %s16, 0
    %p147 = por %p145, %p146
    %p148 = scmp.ne.s32.totalorder %s134, %s135
    %p149 = scmp.eq.s32.totalorder %s17, 7
    %p150 = por %p148, %p149
    %p152 = scmp.ne.s32.totalorder %s135, %s151
    %p153 = scmp.eq.s32.totalorder %s17, 0
    %p154 = por %p152, %p153
    %p155 = scmp.le.s32.totalorder 1, %s11
    %p156 = scmp.lt.s32.totalorder %s11, 9
    %p157 = pnand %p155, %p156
    %p158 = pneg %p157
    // Predicated region
    $region9: #{tpu_custom_call.1} parent=5 // pred_check
      _
    $region10: #{tpu_custom_call.1} parent=5 // pred_check_branch
      %160 = sbr.rel (%p157) target = $region12
    $region11: #{tpu_custom_call.1} parent=5 // pred_region
      %s161 = ssub.s32 %s11, 1
      // Predicated region
      $region13: #{tpu_custom_call.1} parent=11 // pred_check
        %p162 = pneg %p58
      $region14: #{tpu_custom_call.1} parent=11 // pred_check_branch
        %164 = sbr.rel (%p162) target = $region16
      $region15: #{tpu_custom_call.1} parent=11 // pred_region
        _
      $region16: #{tpu_custom_call.1} parent=11 // pred_fallthru
        _
      // Predicated region
      $region17: #{tpu_custom_call.1} parent=11 // pred_check
        %p165 = pneg %p79
      $region18: #{tpu_custom_call.1} parent=11 // pred_check_branch
        %167 = sbr.rel (%p165) target = $region20
      $region19: #{tpu_custom_call.1} parent=11 // pred_region
        _
      $region20: #{tpu_custom_call.1} parent=11 // pred_fallthru
        _
      // Predicated region
      $region21: #{tpu_custom_call.1} parent=11 // pred_check
        %p168 = pneg %p100
      $region22: #{tpu_custom_call.1} parent=11 // pred_check_branch
        %170 = sbr.rel (%p168) target = $region24
      $region23: #{tpu_custom_call.1} parent=11 // pred_region
        _
      $region24: #{tpu_custom_call.1} parent=11 // pred_fallthru
        _
      // Predicated region
      $region25: #{tpu_custom_call.1} parent=11 // pred_check
        %p171 = pneg %p121
      $region26: #{tpu_custom_call.1} parent=11 // pred_check_branch
        %173 = sbr.rel (%p171) target = $region28
      $region27: #{tpu_custom_call.1} parent=11 // pred_region
        _
      $region28: #{tpu_custom_call.1} parent=11 // pred_fallthru
        _
    $region12: #{tpu_custom_call.1} parent=5 // pred_fallthru
      _
    %p174 = scmp.lt.s32.totalorder %s11, 8
    // Predicated region
    $region29: #{tpu_custom_call.1} parent=5 // pred_check
      %p175 = pneg %p174
    $region30: #{tpu_custom_call.1} parent=5 // pred_check_branch
      %177 = sbr.rel (%p175) target = $region32
    $region31: #{tpu_custom_call.1} parent=5 // pred_region
      // Predicated region
      $region33: #{tpu_custom_call.1} parent=31 // pred_check
        %p178 = pneg %p31
      $region34: #{tpu_custom_call.1} parent=31 // pred_check_branch
        %180 = sbr.rel (%p178) target = $region36
      $region35: #{tpu_custom_call.1} parent=31 // pred_region
        %s181 = smul.u32 4, %s11
        %p182 = scmp.lt.s32.totalorder %s181, 31
        %s183 = scalar_select %p182, %s181, 31
        %s184 = smul.addr %s183, 8
        %s185 = scalar_lea.vmem %s0, %s184
        %s186 = smul.u32 4, %s11
      $region36: #{tpu_custom_call.1} parent=31 // pred_fallthru
        _
    $region32: #{tpu_custom_call.1} parent=5 // pred_fallthru
      _
    %p187 = scmp.le.s32.totalorder 1, %s11
    %p188 = scmp.lt.s32.totalorder %s11, 9
    %p189 = pnand %p187, %p188
    %p190 = pneg %p189
    // Predicated region
    $region37: #{tpu_custom_call.1} parent=5 // pred_check
      _
    $region38: #{tpu_custom_call.1} parent=5 // pred_check_branch
      %192 = sbr.rel (%p189) target = $region40
    $region39: #{tpu_custom_call.1} parent=5 // pred_region
      %s193 = ssub.s32 %s11, 1
      %s194 = smul.u32 4, %s16
      %p195 = scmp.lt.s32.totalorder %s194, 31
      %s196 = scalar_select %p195, %s194, 31
      %s197 = smul.addr %s196, 8
      %s198 = scalar_lea.vmem %s0, %s197
      %p199 = pneg %p37
      %p200 = pneg %p34
      %p201 = pneg %p58
      %p202 = pneg %p55
      %p203 = pneg %p79
      %p204 = pneg %p76
      %p205 = pneg %p100
      %p206 = pneg %p97
      %p207 = pneg %p121
      %p208 = pneg %p118
      %p209 = pneg %p147
      %p210 = pneg %p144
      %s211 = smul.u32 4, %s16
      %p212 = scmp.lt.s32.totalorder %s211, 31
      %s213 = scalar_select %p212, %s211, 31
      %s214 = smul.addr %s213, 4
      %s215 = scalar_lea.vmem %s5, %s214
      %s216 = smul.u32 4, %s16
      %p217 = scmp.lt.s32.totalorder %s216, 31
      %s218 = scalar_select %p217, %s216, 31
      %s219 = smul.addr %s218, 8
      %s220 = scalar_lea.vmem %s0, %s219
      %s221 = smul.u32 4, %s16
      %s222 = smul.u32 4, %s16
      %p223 = scmp.lt.s32.totalorder %s222, 31
      %s224 = scalar_select %p223, %s222, 31
      %s225 = smul.addr %s224, 4
      %s226 = scalar_lea.vmem %s5, %s225
      %s227 = smul.u32 4, %s16
      %v229 = vld [vmem:[%s220] sm:$0xff]
      %v230 = vld [vmem:[%s220 + $0x8] sm:$0xff]
      %v231 = vld [vmem:[%s220 + $0x10] sm:$0xff]
      %v232 = vld [vmem:[%s220 + $0x18] sm:$0xff]
      %v233 = vld [vmem:[%s1] sm:$0x1]
      %235 = vset.pattern.permute.xlu0 0
      %236 = vperm.xlu0 %235, %v229
      %v237 = vpop.permute.xlu0 %236
      %240 = vset.pattern.permute.xlu0 0
      %241 = vperm.xlu0 %240, %v230
      %v242 = vpop.permute.xlu0 %241
      %245 = vset.pattern.permute.xlu0 0
      %246 = vperm.xlu0 %245, %v231
      %v247 = vpop.permute.xlu0 %246
      %250 = vset.pattern.permute.xlu0 0
      %251 = vperm.xlu0 %250, %v232
      %v252 = vpop.permute.xlu0 %251
      %v255 = vlaneseq
      %v256 = vshrl.u32 %v255, 7
      %v257 = vsub.s32 0, %v256
      %v258 = vrot.slane %v233, %v257
      %v260 = vmul.f32 %v237, %v258
      %v261 = vmul.f32 %v242, %v258
      %v262 = vmul.f32 %v247, %v258
      %v263 = vmul.f32 %v252, %v258
      %v264 = vld [vmem:[%s2] sm:$0x1]
      %v266 = vlaneseq
      %v267 = vshrl.u32 %v266, 7
      %v268 = vsub.s32 0, %v267
      %v269 = vrot.slane %v264, %v268
      %v271 = vadd.f32 %v260, %v269
      %v272 = vadd.f32 %v261, %v269
      %v273 = vadd.f32 %v262, %v269
      %v274 = vadd.f32 %v263, %v269
      %v275 = vand.u32 2147483647, %v271
      %vm276 = vcmp.le.f32.partialorder %v275, 0.7853982
      %vm277 = vcmp.lt.s32.totalorder %v271, 0
      %v278 = vand.u32 %v271, 2139095040
      %v279 = vshrl.u32 %v278, 23
      %v280 = vsub.s32 %v279, 127
      %v281 = vand.u32 2147483647, %v271
      %v282 = vand.u32 %v281, 8388607
      %v283 = vor.u32 %v282, 8388608
      %v284 = vsub.s32 0, %v283
      %v285 = vadd.s32 %v280, 1
      %vm286 = vcmp.gt.s32.totalorder %v285, 0
      %v287 = vsel %vm286, %v285, 0
      %v288 = vshrl.u32 %v287, 5
      %v289 = vand.u32 %v287, 31
      %v290 = vsub.s32 32, %v289
      %v291 = vshrl.u32 683565275, %v290
      %v292 = vshll.u32 683565275, %v289
      %v293 = vshrl.u32 2475754826, %v290
      %v294 = vor.u32 %v292, %v293
      %v295 = vshll.u32 2475754826, %v289
      %v296 = vshrl.u32 2131351028, %v290
      %v297 = vor.u32 %v295, %v296
      %v298 = vshll.u32 2131351028, %v289
      %v299 = vshrl.u32 2102212464, %v290
      %v300 = vor.u32 %v298, %v299
      %v301 = vshll.u32 2102212464, %v289
      %v302 = vshrl.u32 920167782, %v290
      %v303 = vor.u32 %v301, %v302
      %v304 = vshll.u32 920167782, %v289
      %v305 = vshrl.u32 1326507024, %v290
      %v306 = vor.u32 %v304, %v305
      %vm307 = vcmp.lt.s32.totalorder %v288, 1
      %vm308 = vcmp.lt.s32.totalorder %v288, 2
      %vm309 = vcmp.lt.s32.totalorder %v288, 3
      %vm310 = vcmp.lt.s32.totalorder %v288, 4
      %v311 = vsel %vm307, %v291, %v294
      %v312 = vsel %vm310, %v300, 2102212464
      %v313 = vsel %vm309, %v297, %v312
      %v314 = vsel %vm308, %v311, %v313
      %v315 = vsel %vm307, %v294, %v297
      %v316 = vsel %vm310, %v303, 920167782
      %v317 = vsel %vm309, %v300, %v316
      %v318 = vsel %vm308, %v315, %v317
      %v319 = vsel %vm307, %v297, %v300
      %v320 = vsel %vm310, %v306, 1326507024
      %v321 = vsel %vm309, %v303, %v320
      %v322 = vsel %vm308, %v319, %v321
      %v323 = vshll.u32 %v283, 8
      %v324 = vmul.u32.u64.compose %v323, %v322
      %v325 = vextract.low.u32 %v324
      %v326 = vextract.high.u32 %v324
      %v327 = vmul.u32.u64.compose %v323, %v318
      %v328 = vextract.low.u32 %v327
      %v329 = vextract.high.u32 %v327
      %v330 = vmul.u32 %v323, %v314
      %v331 = vadd.s32 %v326, %v328
      %vm332 = vc.u32 %v326, %v328
      %v333 = vadd.s32 %v329, 1
      %v334 = vsel %vm332, %v333, %v329
      %v335 = vadd.s32 %v330, %v334
      %v336 = vadd.s32 %v335, 536870912
      %v337 = vshrl.u32 %v336, 30
      %v338 = vshll.u32 %v337, 30
      %v339 = vsub.s32 %v335, %v338
      %vm340 = vcmp.lt.s32.totalorder %v339, 0
      %v341 = vsub.s32 0, %v339
      %v342 = vsel %vm340, %v341, %v339
      %v343 = vclz %v342
      %v344 = vsub.s32 %v343, 2
      %vm345 = vcmp.gt.s32.totalorder 0, %v344
      %v346 = vsel %vm345, 0, %v344
      %v347 = vsub.s32 32, %v346
      %v348 = vshll.u32 %v339, %v346
      %v349 = vshrl.u32 %v331, %v347
      %v350 = vor.u32 %v348, %v349
      %v351 = vsub.s32 4294967266, %v346
      %v352 = vadd.s32 %v351, 127
      %v353 = vshll.u32 %v352, 23
      %v354 = vor.u32 4788187, %v353
      %v355 = vand.u32 2147483647, %v354
      %v357 = vcvt.s32.f32 %v350
      %v358 = vmul.f32 %v357, %v355
      %v359 = vxor.u32 %v358, 2147483648
      %v360 = vsel %vm277, %v359, %v358
      %v361 = vsub.s32 4, %v337
      %v362 = vsel %vm277, %v361, %v337
      %v363 = vsel %vm276, %v271, %v360
      %v364 = vsel %vm276, 0, %v362
      %v365 = vcosq.f32.pop %v363
      %v366 = vsinq.f32.pop %v363
      %vm367 = vweird.f32 %v271
      %v368 = vadd.s32 %v364, 3
      %v369 = vand.u32 %v368, 3
      %vm370 = vcmp.lt.s32.totalorder %v369, 2
      %vm371 = vcmp.eq.s32.totalorder %v369, 0
      %v372 = vxor.u32 %v366, 2147483648
      %v373 = vsel %vm371, %v365, %v372
      %vm374 = vcmp.eq.s32.totalorder %v369, 2
      %v375 = vxor.u32 %v365, 2147483648
      %v376 = vsel %vm374, %v375, %v366
      %v377 = vsel %vm370, %v373, %v376
      %v378 = vsel %vm367, nan, %v377
      %v379 = vand.u32 2147483647, %v272
      %vm380 = vcmp.le.f32.partialorder %v379, 0.7853982
      %vm381 = vcmp.lt.s32.totalorder %v272, 0
      %v382 = vand.u32 %v272, 2139095040
      %v383 = vshrl.u32 %v382, 23
      %v384 = vsub.s32 %v383, 127
      %v385 = vand.u32 2147483647, %v272
      %v386 = vand.u32 %v385, 8388607
      %v387 = vor.u32 %v386, 8388608
      %v388 = vsub.s32 0, %v387
      %v389 = vadd.s32 %v384, 1
      %vm390 = vcmp.gt.s32.totalorder %v389, 0
      %v391 = vsel %vm390, %v389, 0
      %v392 = vshrl.u32 %v391, 5
      %v393 = vand.u32 %v391, 31
      %v394 = vsub.s32 32, %v393
      %v395 = vshrl.u32 683565275, %v394
      %v396 = vshll.u32 683565275, %v393
      %v397 = vshrl.u32 2475754826, %v394
      %v398 = vor.u32 %v396, %v397
      %v399 = vshll.u32 2475754826, %v393
      %v400 = vshrl.u32 2131351028, %v394
      %v401 = vor.u32 %v399, %v400
      %v402 = vshll.u32 2131351028, %v393
      %v403 = vshrl.u32 2102212464, %v394
      %v404 = vor.u32 %v402, %v403
      %v405 = vshll.u32 2102212464, %v393
      %v406 = vshrl.u32 920167782, %v394
      %v407 = vor.u32 %v405, %v406
      %v408 = vshll.u32 920167782, %v393
      %v409 = vshrl.u32 1326507024, %v394
      %v410 = vor.u32 %v408, %v409
      %vm411 = vcmp.lt.s32.totalorder %v392, 1
      %vm412 = vcmp.lt.s32.totalorder %v392, 2
      %vm413 = vcmp.lt.s32.totalorder %v392, 3
      %vm414 = vcmp.lt.s32.totalorder %v392, 4
      %v415 = vsel %vm411, %v395, %v398
      %v416 = vsel %vm414, %v404, 2102212464
      %v417 = vsel %vm413, %v401, %v416
      %v418 = vsel %vm412, %v415, %v417
      %v419 = vsel %vm411, %v398, %v401
      %v420 = vsel %vm414, %v407, 920167782
      %v421 = vsel %vm413, %v404, %v420
      %v422 = vsel %vm412, %v419, %v421
      %v423 = vsel %vm411, %v401, %v404
      %v424 = vsel %vm414, %v410, 1326507024
      %v425 = vsel %vm413, %v407, %v424
      %v426 = vsel %vm412, %v423, %v425
      %v427 = vshll.u32 %v387, 8
      %v428 = vmul.u32.u64.compose %v427, %v426
      %v429 = vextract.low.u32 %v428
      %v430 = vextract.high.u32 %v428
      %v431 = vmul.u32.u64.compose %v427, %v422
      %v432 = vextract.low.u32 %v431
      %v433 = vextract.high.u32 %v431
      %v434 = vmul.u32 %v427, %v418
      %v435 = vadd.s32 %v430, %v432
      %vm436 = vc.u32 %v430, %v432
      %v437 = vadd.s32 %v433, 1
      %v438 = vsel %vm436, %v437, %v433
      %v439 = vadd.s32 %v434, %v438
      %v440 = vadd.s32 %v439, 536870912
      %v441 = vshrl.u32 %v440, 30
      %v442 = vshll.u32 %v441, 30
      %v443 = vsub.s32 %v439, %v442
      %vm444 = vcmp.lt.s32.totalorder %v443, 0
      %v445 = vsub.s32 0, %v443
      %v446 = vsel %vm444, %v445, %v443
      %v447 = vclz %v446
      %v448 = vsub.s32 %v447, 2
      %vm449 = vcmp.gt.s32.totalorder 0, %v448
      %v450 = vsel %vm449, 0, %v448
      %v451 = vsub.s32 32, %v450
      %v452 = vshll.u32 %v443, %v450
      %v453 = vshrl.u32 %v435, %v451
      %v454 = vor.u32 %v452, %v453
      %v455 = vsub.s32 4294967266, %v450
      %v456 = vadd.s32 %v455, 127
      %v457 = vshll.u32 %v456, 23
      %v458 = vor.u32 4788187, %v457
      %v459 = vand.u32 2147483647, %v458
      %v461 = vcvt.s32.f32 %v454
      %v462 = vmul.f32 %v461, %v459
      %v463 = vxor.u32 %v462, 2147483648
      %v464 = vsel %vm381, %v463, %v462
      %v465 = vsub.s32 4, %v441
      %v466 = vsel %vm381, %v465, %v441
      %v467 = vsel %vm380, %v272, %v464
      %v468 = vsel %vm380, 0, %v466
      %v469 = vcosq.f32.pop %v467
      %v470 = vsinq.f32.pop %v467
      %vm471 = vweird.f32 %v272
      %v472 = vadd.s32 %v468, 3
      %v473 = vand.u32 %v472, 3
      %vm474 = vcmp.lt.s32.totalorder %v473, 2
      %vm475 = vcmp.eq.s32.totalorder %v473, 0
      %v476 = vxor.u32 %v470, 2147483648
      %v477 = vsel %vm475, %v469, %v476
      %vm478 = vcmp.eq.s32.totalorder %v473, 2
      %v479 = vxor.u32 %v469, 2147483648
      %v480 = vsel %vm478, %v479, %v470
      %v481 = vsel %vm474, %v477, %v480
      %v482 = vsel %vm471, nan, %v481
      %v483 = vand.u32 2147483647, %v273
      %vm484 = vcmp.le.f32.partialorder %v483, 0.7853982
      %vm485 = vcmp.lt.s32.totalorder %v273, 0
      %v486 = vand.u32 %v273, 2139095040
      %v487 = vshrl.u32 %v486, 23
      %v488 = vsub.s32 %v487, 127
      %v489 = vand.u32 2147483647, %v273
      %v490 = vand.u32 %v489, 8388607
      %v491 = vor.u32 %v490, 8388608
      %v492 = vsub.s32 0, %v491
      %v493 = vadd.s32 %v488, 1
      %vm494 = vcmp.gt.s32.totalorder %v493, 0
      %v495 = vsel %vm494, %v493, 0
      %v496 = vshrl.u32 %v495, 5
      %v497 = vand.u32 %v495, 31
      %v498 = vsub.s32 32, %v497
      %v499 = vshrl.u32 683565275, %v498
      %v500 = vshll.u32 683565275, %v497
      %v501 = vshrl.u32 2475754826, %v498
      %v502 = vor.u32 %v500, %v501
      %v503 = vshll.u32 2475754826, %v497
      %v504 = vshrl.u32 2131351028, %v498
      %v505 = vor.u32 %v503, %v504
      %v506 = vshll.u32 2131351028, %v497
      %v507 = vshrl.u32 2102212464, %v498
      %v508 = vor.u32 %v506, %v507
      %v509 = vshll.u32 2102212464, %v497
      %v510 = vshrl.u32 920167782, %v498
      %v511 = vor.u32 %v509, %v510
      %v512 = vshll.u32 920167782, %v497
      %v513 = vshrl.u32 1326507024, %v498
      %v514 = vor.u32 %v512, %v513
      %vm515 = vcmp.lt.s32.totalorder %v496, 1
      %vm516 = vcmp.lt.s32.totalorder %v496, 2
      %vm517 = vcmp.lt.s32.totalorder %v496, 3
      %vm518 = vcmp.lt.s32.totalorder %v496, 4
      %v519 = vsel %vm515, %v499, %v502
      %v520 = vsel %vm518, %v508, 2102212464
      %v521 = vsel %vm517, %v505, %v520
      %v522 = vsel %vm516, %v519, %v521
      %v523 = vsel %vm515, %v502, %v505
      %v524 = vsel %vm518, %v511, 920167782
      %v525 = vsel %vm517, %v508, %v524
      %v526 = vsel %vm516, %v523, %v525
      %v527 = vsel %vm515, %v505, %v508
      %v528 = vsel %vm518, %v514, 1326507024
      %v529 = vsel %vm517, %v511, %v528
      %v530 = vsel %vm516, %v527, %v529
      %v531 = vshll.u32 %v491, 8
      %v532 = vmul.u32.u64.compose %v531, %v530
      %v533 = vextract.low.u32 %v532
      %v534 = vextract.high.u32 %v532
      %v535 = vmul.u32.u64.compose %v531, %v526
      %v536 = vextract.low.u32 %v535
      %v537 = vextract.high.u32 %v535
      %v538 = vmul.u32 %v531, %v522
      %v539 = vadd.s32 %v534, %v536
      %vm540 = vc.u32 %v534, %v536
      %v541 = vadd.s32 %v537, 1
      %v542 = vsel %vm540, %v541, %v537
      %v543 = vadd.s32 %v538, %v542
      %v544 = vadd.s32 %v543, 536870912
      %v545 = vshrl.u32 %v544, 30
      %v546 = vshll.u32 %v545, 30
      %v547 = vsub.s32 %v543, %v546
      %vm548 = vcmp.lt.s32.totalorder %v547, 0
      %v549 = vsub.s32 0, %v547
      %v550 = vsel %vm548, %v549, %v547
      %v551 = vclz %v550
      %v552 = vsub.s32 %v551, 2
      %vm553 = vcmp.gt.s32.totalorder 0, %v552
      %v554 = vsel %vm553, 0, %v552
      %v555 = vsub.s32 32, %v554
      %v556 = vshll.u32 %v547, %v554
      %v557 = vshrl.u32 %v539, %v555
      %v558 = vor.u32 %v556, %v557
      %v559 = vsub.s32 4294967266, %v554
      %v560 = vadd.s32 %v559, 127
      %v561 = vshll.u32 %v560, 23
      %v562 = vor.u32 4788187, %v561
      %v563 = vand.u32 2147483647, %v562
      %v565 = vcvt.s32.f32 %v558
      %v566 = vmul.f32 %v565, %v563
      %v567 = vxor.u32 %v566, 2147483648
      %v568 = vsel %vm485, %v567, %v566
      %v569 = vsub.s32 4, %v545
      %v570 = vsel %vm485, %v569, %v545
      %v571 = vsel %vm484, %v273, %v568
      %v572 = vsel %vm484, 0, %v570
      %v573 = vcosq.f32.pop %v571
      %v574 = vsinq.f32.pop %v571
      %vm575 = vweird.f32 %v273
      %v576 = vadd.s32 %v572, 3
      %v577 = vand.u32 %v576, 3
      %vm578 = vcmp.lt.s32.totalorder %v577, 2
      %vm579 = vcmp.eq.s32.totalorder %v577, 0
      %v580 = vxor.u32 %v574, 2147483648
      %v581 = vsel %vm579, %v573, %v580
      %vm582 = vcmp.eq.s32.totalorder %v577, 2
      %v583 = vxor.u32 %v573, 2147483648
      %v584 = vsel %vm582, %v583, %v574
      %v585 = vsel %vm578, %v581, %v584
      %v586 = vsel %vm575, nan, %v585
      %v587 = vand.u32 2147483647, %v274
      %vm588 = vcmp.le.f32.partialorder %v587, 0.7853982
      %vm589 = vcmp.lt.s32.totalorder %v274, 0
      %v590 = vand.u32 %v274, 2139095040
      %v591 = vshrl.u32 %v590, 23
      %v592 = vsub.s32 %v591, 127
      %v593 = vand.u32 2147483647, %v274
      %v594 = vand.u32 %v593, 8388607
      %v595 = vor.u32 %v594, 8388608
      %v596 = vsub.s32 0, %v595
      %v597 = vadd.s32 %v592, 1
      %vm598 = vcmp.gt.s32.totalorder %v597, 0
      %v599 = vsel %vm598, %v597, 0
      %v600 = vshrl.u32 %v599, 5
      %v601 = vand.u32 %v599, 31
      %v602 = vsub.s32 32, %v601
      %v603 = vshrl.u32 683565275, %v602
      %v604 = vshll.u32 683565275, %v601
      %v605 = vshrl.u32 2475754826, %v602
      %v606 = vor.u32 %v604, %v605
      %v607 = vshll.u32 2475754826, %v601
      %v608 = vshrl.u32 2131351028, %v602
      %v609 = vor.u32 %v607, %v608
      %v610 = vshll.u32 2131351028, %v601
      %v611 = vshrl.u32 2102212464, %v602
      %v612 = vor.u32 %v610, %v611
      %v613 = vshll.u32 2102212464, %v601
      %v614 = vshrl.u32 920167782, %v602
      %v615 = vor.u32 %v613, %v614
      %v616 = vshll.u32 920167782, %v601
      %v617 = vshrl.u32 1326507024, %v602
      %v618 = vor.u32 %v616, %v617
      %vm619 = vcmp.lt.s32.totalorder %v600, 1
      %vm620 = vcmp.lt.s32.totalorder %v600, 2
      %vm621 = vcmp.lt.s32.totalorder %v600, 3
      %vm622 = vcmp.lt.s32.totalorder %v600, 4
      %v623 = vsel %vm619, %v603, %v606
      %v624 = vsel %vm622, %v612, 2102212464
      %v625 = vsel %vm621, %v609, %v624
      %v626 = vsel %vm620, %v623, %v625
      %v627 = vsel %vm619, %v606, %v609
      %v628 = vsel %vm622, %v615, 920167782
      %v629 = vsel %vm621, %v612, %v628
      %v630 = vsel %vm620, %v627, %v629
      %v631 = vsel %vm619, %v609, %v612
      %v632 = vsel %vm622, %v618, 1326507024
      %v633 = vsel %vm621, %v615, %v632
      %v634 = vsel %vm620, %v631, %v633
      %v635 = vshll.u32 %v595, 8
      %v636 = vmul.u32.u64.compose %v635, %v634
      %v637 = vextract.low.u32 %v636
      %v638 = vextract.high.u32 %v636
      %v639 = vmul.u32.u64.compose %v635, %v630
      %v640 = vextract.low.u32 %v639
      %v641 = vextract.high.u32 %v639
      %v642 = vmul.u32 %v635, %v626
      %v643 = vadd.s32 %v638, %v640
      %vm644 = vc.u32 %v638, %v640
      %v645 = vadd.s32 %v641, 1
      %v646 = vsel %vm644, %v645, %v641
      %v647 = vadd.s32 %v642, %v646
      %v648 = vadd.s32 %v647, 536870912
      %v649 = vshrl.u32 %v648, 30
      %v650 = vshll.u32 %v649, 30
      %v651 = vsub.s32 %v647, %v650
      %vm652 = vcmp.lt.s32.totalorder %v651, 0
      %v653 = vsub.s32 0, %v651
      %v654 = vsel %vm652, %v653, %v651
      %v655 = vclz %v654
      %v656 = vsub.s32 %v655, 2
      %vm657 = vcmp.gt.s32.totalorder 0, %v656
      %v658 = vsel %vm657, 0, %v656
      %v659 = vsub.s32 32, %v658
      %v660 = vshll.u32 %v651, %v658
      %v661 = vshrl.u32 %v643, %v659
      %v662 = vor.u32 %v660, %v661
      %v663 = vsub.s32 4294967266, %v658
      %v664 = vadd.s32 %v663, 127
      %v665 = vshll.u32 %v664, 23
      %v666 = vor.u32 4788187, %v665
      %v667 = vand.u32 2147483647, %v666
      %v669 = vcvt.s32.f32 %v662
      %v670 = vmul.f32 %v669, %v667
      %v671 = vxor.u32 %v670, 2147483648
      %v672 = vsel %vm589, %v671, %v670
      %v673 = vsub.s32 4, %v649
      %v674 = vsel %vm589, %v673, %v649
      %v675 = vsel %vm588, %v274, %v672
      %v676 = vsel %vm588, 0, %v674
      %v677 = vcosq.f32.pop %v675
      %v678 = vsinq.f32.pop %v675
      %vm679 = vweird.f32 %v274
      %v680 = vadd.s32 %v676, 3
      %v681 = vand.u32 %v680, 3
      %vm682 = vcmp.lt.s32.totalorder %v681, 2
      %vm683 = vcmp.eq.s32.totalorder %v681, 0
      %v684 = vxor.u32 %v678, 2147483648
      %v685 = vsel %vm683, %v677, %v684
      %vm686 = vcmp.eq.s32.totalorder %v681, 2
      %v687 = vxor.u32 %v677, 2147483648
      %v688 = vsel %vm686, %v687, %v678
      %v689 = vsel %vm682, %v685, %v688
      %v690 = vsel %vm679, nan, %v689
      %v691 = vpack.c.bf16 %v482, %v378
      %v692 = vpack.c.bf16 %v690, %v586
      %v693 = vld [vmem:[%s3] sm:$0xf]
      %v694 = vld [vmem:[%s3 + $0x4] sm:$0xf]
      %v695 = vld [vmem:[%s3 + $0x8] sm:$0xf]
      %v696 = vld [vmem:[%s3 + $0xc] sm:$0xf]
      %v697 = vld [vmem:[%s4] sm:$0x1]
      %v699 = vlaneseq
      %v700 = vshrl.u32 %v699, 7
      %v701 = vsub.s32 0, %v700
      %v702 = vrot.slane %v697, %v701
      %v708 = vunpack.c.l.b16 %v693
      %v709 = vunpack.c.l.b16 %v694
      %v710 = vunpack.c.l.b16 %v695
      %v711 = vunpack.c.l.b16 %v696
      %v712 = vpack.c.b16 %v709, %v708
      %v713 = vpack.c.b16 %v711, %v710
      %vm716 = vcmask 261120
      %v718 = vsel %vm716, %v691, 0
      %v721 = vsel %vm716, %v692, 0
      %723 = vmatprep.subr.bf16.mxu0 0
      %724 = vmatpush1.bf16.msra.mxu0 %v712
      %725 = vmatprep.subr.bf16.mxu0 0
      %726 = vmatpush1.bf16.msra.mxu0 %v713
      %727 = vmatprep.subr.bf16.mxu0 0
      %728 = vmatpush1.bf16.msra.mxu0 0
      %729 = vmatprep.subr.bf16.mxu0 0
      %730 = vmatpush1.bf16.msra.mxu0 0
      %731 = vmatprep.subr.bf16.mxu0 0
      %732 = vmatpush1.bf16.msra.mxu0 0
      %733 = vmatprep.subr.bf16.mxu0 0
      %734 = vmatpush1.bf16.msra.mxu0 0
      %735 = vmatprep.subr.bf16.mxu0 0
      %736 = vmatpush1.bf16.msra.mxu0 0
      %737 = vmatprep.subr.bf16.mxu0 0
      %738 = vmatpush1.bf16.msra.mxu0 0
      %739 = vmatprep.subr.bf16.mxu0 0
      %740 = vmatpush1.bf16.msra.mxu0 0
      %741 = vmatprep.subr.bf16.mxu0 0
      %742 = vmatpush1.bf16.msra.mxu0 0
      %743 = vmatprep.subr.bf16.mxu0 0
      %744 = vmatpush1.bf16.msra.mxu0 0
      %745 = vmatprep.subr.bf16.mxu0 0
      %746 = vmatpush1.bf16.msra.mxu0 0
      %747 = vmatprep.subr.bf16.mxu0 0
      %748 = vmatpush1.bf16.msra.mxu0 0
      %749 = vmatprep.subr.bf16.mxu0 0
      %750 = vmatpush1.bf16.msra.mxu0 0
      %751 = vmatprep.subr.bf16.mxu0 0
      %752 = vmatpush1.bf16.msra.mxu0 0
      %753 = vmatprep.subr.bf16.mxu0 0
      %754 = vmatpush1.bf16.msra.mxu0 0
      %755 = vmatprep.mubr.bf16.mxu0 0
      %756 = vmatmul.mubr.bf16.gmra.mrb[0].mxu0 %v718
      %v757 = vpop.f32.mrb[0].mxu0
      %v758 = vadd.f32 %v702, %v757
      %v759 = vpop.f32.mrb[0].mxu0
      %v760 = vpop.f32.mrb[0].mxu0
      %v761 = vadd.f32 %v702, %v760
      %v762 = vpop.f32.mrb[0].mxu0
      %763 = vmatprep.mubr.bf16.mxu0 0
      %764 = vmatmul.mubr.bf16.gmra.mrb[0].mxu0 %v721
      %v765 = vpop.f32.mrb[0].mxu0
      %v766 = vadd.f32 %v702, %v765
      %v767 = vpop.f32.mrb[0].mxu0
      %v768 = vpop.f32.mrb[0].mxu0
      %v769 = vadd.f32 %v702, %v768
      %v770 = vpop.f32.mrb[0].mxu0
      %771 = vdwg.mxu0
      %v772 = vpack.c.bf16 %v761, %v758
      %v773 = vpack.c.bf16 %v769, %v766
      %v776 = vunpack.c.l.b16 %v772
      %v777 = vunpack.c.h.b16 %v772
      %v778 = vunpack.c.l.b16 %v773
      %v779 = vunpack.c.h.b16 %v773
      %v780 = vpack.c.b16 %v776, %v776
      %v781 = vpack.c.b16 %v777, %v777
      %v782 = vpack.c.b16 %v778, %v778
      %v783 = vpack.c.b16 %v779, %v779
      %vm788 = vcmask 257024
      %789 = vst.msk [vmem:[%s226] sm:$0xf] %vm788, %v780
      %790 = vst.msk [vmem:[%s226 + $0x4] sm:$0xf] %vm788, %v781
      %791 = vst.msk [vmem:[%s226 + $0x8] sm:$0xf] %vm788, %v782
      %792 = vst.msk [vmem:[%s226 + $0xc] sm:$0xf] %vm788, %v783
      %s793 = smul.u32 4, %s16
      %p794 = scmp.lt.s32.totalorder %s793, 31
      %s795 = scalar_select %p794, %s793, 31
      %s796 = smul.addr %s795, 4
      %s797 = scalar_lea.vmem %s5, %s796
      // Predicated region
      $region41: #{tpu_custom_call.1} parent=39 // pred_check
        %p798 = pneg %p144
      $region42: #{tpu_custom_call.1} parent=39 // pred_check_branch
        %800 = sbr.rel (%p798) target = $region44
      $region43: #{tpu_custom_call.1} parent=39 // pred_region
        %s801 = smul.u32 4, %s16
      $region44: #{tpu_custom_call.1} parent=39 // pred_fallthru
        _
    $region40: #{tpu_custom_call.1} parent=5 // pred_fallthru
      _
    %p802 = scmp.le.s32.totalorder 2, %s11
    // Predicated region
    $region45: #{tpu_custom_call.1} parent=5 // pred_check
      %p803 = pneg %p802
    $region46: #{tpu_custom_call.1} parent=5 // pred_check_branch
      %805 = sbr.rel (%p803) target = $region48
    $region47: #{tpu_custom_call.1} parent=5 // pred_region
      %s806 = ssub.s32 %s11, 2
      // Predicated region
      $region49: #{tpu_custom_call.1} parent=47 // pred_check
        %p807 = pneg %p150
      $region50: #{tpu_custom_call.1} parent=47 // pred_check_branch
        %809 = sbr.rel (%p807) target = $region52
      $region51: #{tpu_custom_call.1} parent=47 // pred_region
        %s810 = smul.u32 4, %s17
        %p811 = scmp.lt.s32.totalorder %s810, 31
        %s812 = scalar_select %p811, %s810, 31
        %s813 = smul.addr %s812, 4
        %s814 = scalar_lea.vmem %s5, %s813
      $region52: #{tpu_custom_call.1} parent=47 // pred_fallthru
        _
    $region48: #{tpu_custom_call.1} parent=5 // pred_fallthru
      _
  $region6: #{tpu_custom_call.1} parent=0 // loop_footer
    %s15 = sadd.s32 1, %s11
  $region7: #{tpu_custom_call.1} parent=0 // loop_footer_branch
    %10 = sbr.rel target = $region3
  $region8: #{tpu_custom_call.1} parent=0 // loop_exit
    _

</llo_original>
